<compile_context>
chip_gen: v7x
topology: tpu7x:2x2x1
jax: 0.10.0
libtpu: 0.0.40
codegen_flags: <defaults>
</compile_context>

<pallas_src>
import functools
import math

import jax
import jax.numpy as jnp
import numpy as np
from jax.experimental import pallas as pl
from jax.experimental.pallas import tpu as pltpu


def _pos_emb_kernel(aux_ref, o_ref):
    """Computes one (TR, W) tile of the flattened sinusoidal table.

    aux_ref : (2, W) f32 trace-time constants
        row 0: a[l] = per_row * freq[l]
        row 1: b[l] = pos_off[l] * freq[l] + phase[l]   (phase = pi/2 on cos lanes)
    o_ref   : (TR, W) f32
        out[r, l] = sin((row0 + r) * a[l] + b[l]) = sin(position*freq + phase)
    """
    tr, w = o_ref.shape
    row0 = pl.multiple_of(pl.program_id(0) * tr, tr)

    a = aux_ref[0:1, :]                                   # (1, W)
    # Fold the per-tile row offset into the per-lane bias once per tile.
    c = aux_ref[1:2, :] + row0.astype(jnp.float32) * a    # (1, W)

    r = jax.lax.broadcasted_iota(jnp.int32, (tr, w), 0).astype(jnp.float32)
    # Single transcendental pass: cos is folded into sin via the +pi/2 phase.
    o_ref[...] = jnp.sin(r * a + c)


def _round_up(x, m):
    return ((x + m - 1) // m) * m


@functools.lru_cache(maxsize=None)
def _pe_table(d_model, max_len):
    """Builds the (1, max_len, d_model) sinusoidal table with one pallas_call.

    Cached per (d_model, max_len) -- the PyTorch register_buffer equivalent.
    """
    assert d_model % 2 == 0, "PyTorch module requires even d_model"

    # Lane-dense flattened layout: W = lcm(d_model, 128) lanes per row, packing
    # `per_row` consecutive positions per row so all stores are full 128-lane.
    g = math.gcd(d_model, 128)
    per_row = 128 // g                    # power of two, <= 64 for even d_model
    w = d_model * per_row                 # multiple of 128
    n_rows = pl.cdiv(max_len, per_row)

    # Trace-time constants (numpy: no per-call XLA ops). For lane l:
    #   column j = l % d_model, position offset = l // d_model
    #   freq(j)  = exp(-2*(j//2) * ln(10000)/d_model)
    #   value    = sin(position*freq + phase), phase = pi/2 on odd (cos) columns
    lane = np.arange(w)
    j = lane % d_model
    freq = np.exp(-(j - (j % 2)).astype(np.float64) * (math.log(10000.0) / d_model))
    phase = (j % 2) * (math.pi / 2.0)
    pos_off = lane // d_model
    a_row = per_row * freq                # row index -> position scale (exact: pow2)
    b_row = pos_off * freq + phase        # per-lane bias (position offset + phase)
    aux = np.stack([a_row, b_row]).astype(np.float32)    # (2, W)

    # Row tiling:
    #  * keep double-buffered f32 output tile pair under ~8 MiB (v5e's scoped
    #    VMEM default is 16 MiB; v7x physical VMEM is 64 MiB),
    #  * split into >= 2 grid steps when there are enough rows so the
    #    "parallel" axis can shard this store-bound work across v7x's two TCs.
    max_tr = max(8, ((8 << 20) // (2 * 4 * w)) // 8 * 8)
    if n_rows >= 16:
        tr = min(_round_up(pl.cdiv(n_rows, 2), 8), max_tr, _round_up(n_rows, 8))
    else:
        tr = n_rows
    grid = (pl.cdiv(n_rows, tr),)

    pe = pl.pallas_call(
        _pos_emb_kernel,
        out_shape=jax.ShapeDtypeStruct((n_rows, w), jnp.float32),
        grid=grid,
        in_specs=[pl.BlockSpec((2, w), lambda i: (0, 0))],
        out_specs=pl.BlockSpec((tr, w), lambda i: (i, 0)),
        compiler_params=pltpu.CompilerParams(
            dimension_semantics=("parallel",)),
    )(aux)

    # Row-major regroup back to (positions, d_model): bitcast-compatible, no
    # copy. The [:max_len] slice is a no-op whenever per_row divides max_len
    # (always true for the default max_len=512 since per_row | 128 | 512).
    pe = pe.reshape(n_rows * per_row, d_model)[:max_len]
    return pe[None]   # (1, max_len, d_model)


class PositionalEmbedding:
    """Mirror of the PyTorch module: table built once, forward is a slice."""

    def __init__(self, d_model, max_len=512):
        self.pe = _pe_table(d_model, max_len)   # register_buffer equivalent

    def __call__(self, x):
        return self.pe[:, : x.shape[1]]


def positional_embedding(x, d_model, max_len=512):
    """Functional form: returns pe[:, :x.shape[1]] of shape (1, seq, d_model)."""
    seq_len = x.shape[1]
    assert seq_len <= max_len, "sequence longer than max_len"
    return _pe_table(d_model, max_len)[:, :seq_len]


def _reference_pe(seq_len, d_model):
    """Pure-JAX reference matching the PyTorch buffer construction."""
    position = jnp.arange(seq_len, dtype=jnp.float32)[:, None]
    div_term = jnp.exp(
        jnp.arange(0, d_model, 2, dtype=jnp.float32)
        * (-(math.log(10000.0) / d_model)))
    pe = jnp.zeros((seq_len, d_model), dtype=jnp.float32)
    pe = pe.at[:, 0::2].set(jnp.sin(position * div_term))
    pe = pe.at[:, 1::2].set(jnp.cos(position * div_term))
    return pe[None]


if __name__ == "__main__":
    batch, seq_len, d_model = 2, 8, 32
    key = jax.random.PRNGKey(0)
    # x's values are never read by the module; only x.shape[1] matters.
    x = jax.random.normal(key, (batch, seq_len, d_model), dtype=jnp.float32)

    mod = PositionalEmbedding(d_model=d_model, max_len=512)
    out = jax.block_until_ready(mod(x))
    ref = _reference_pe(seq_len, d_model)
    assert out.shape == (1, seq_len, d_model), out.shape
    assert out.dtype == jnp.float32
    assert jnp.allclose(out, ref, atol=1e-5, rtol=1e-5), \
        float(jnp.max(jnp.abs(out - ref)))

    # Second forward reuses the cached buffer (no new pallas_call).
    out_b = jax.block_until_ready(positional_embedding(x, d_model=d_model))
    assert jnp.allclose(out_b, ref, atol=1e-5, rtol=1e-5)

    # Natural-layout path (d_model % 128 == 0 -> per_row == 1).
    x2 = jnp.zeros((batch, 16, 128), dtype=jnp.float32)
    out2 = jax.block_until_ready(positional_embedding(x2, d_model=128, max_len=512))
    ref2 = _reference_pe(16, 128)
    assert out2.shape == (1, 16, 128)
    assert jnp.allclose(out2, ref2, atol=1e-5, rtol=1e-5), \
        float(jnp.max(jnp.abs(out2 - ref2)))

    # Loose full-table sanity check: the +pi/2 cos fold plus large-argument
    # range reduction drift from direct cos by O(1e-4) near position ~512.
    full = jax.block_until_ready(_pe_table(32, 512))
    ref_full = _reference_pe(512, 32)
    assert float(jnp.max(jnp.abs(full - ref_full))) < 5e-3

    print("KERNEL_OK")
</pallas_src>

<mosaic_0001>
module attributes {stable_mosaic.version = 11 : i64} {
  func.func @_pos_emb_kernel(%arg0: i32, %arg1: memref<2x128xf32, #tpu.memory_space<vmem>>, %arg2: memref<64x128xf32, #tpu.memory_space<vmem>>) attributes {dimension_semantics = [#tpu.dimension_semantics<parallel>], iteration_bounds = array<i64: 2>, scalar_prefetch = 0 : i64, scratch_operands = 0 : i64, tpu.core_type = #tpu.core_type<tc>, window_params = [{pipeline_mode = #tpu.pipeline_mode<synchronous>, transform_indices = @transform_0, window_bounds = array<i64: 2, 128>}, {transform_indices = @transform_1, window_bounds = array<i64: 64, 128>}]} {
    %c64_i32 = arith.constant 64 : i32
    %0 = arith.muli %arg0, %c64_i32 : i32
    %1 = tpu.assume_multiple %0, 64 : i32
    %c0 = arith.constant 0 : index
    %c0_0 = arith.constant 0 : index
    %2 = vector.load %arg1[%c0, %c0_0] : memref<2x128xf32, #tpu.memory_space<vmem>>, vector<1x128xf32>
    %c1 = arith.constant 1 : index
    %c0_1 = arith.constant 0 : index
    %3 = vector.load %arg1[%c1, %c0_1] : memref<2x128xf32, #tpu.memory_space<vmem>>, vector<1x128xf32>
    %4 = arith.sitofp %1 : i32 to f32
    %5 = vector.broadcast %4 : f32 to vector<1x128xf32>
    %6 = arith.mulf %5, %2 : vector<1x128xf32>
    %7 = arith.addf %3, %6 : vector<1x128xf32>
    %8 = tpu.iota {dimensions = array<i32: 0>} : vector<64x128xi32>
    %9 = arith.sitofp %8 : vector<64x128xi32> to vector<64x128xf32>
    %10 = vector.broadcast %2 : vector<1x128xf32> to vector<64x128xf32>
    %11 = arith.mulf %9, %10 : vector<64x128xf32>
    %12 = vector.broadcast %7 : vector<1x128xf32> to vector<64x128xf32>
    %13 = arith.addf %11, %12 : vector<64x128xf32>
    %14 = math.sin %13 : vector<64x128xf32>
    %c0_2 = arith.constant 0 : index
    %c0_3 = arith.constant 0 : index
    %15 = vector.load %arg2[%c0_2, %c0_3] : memref<64x128xf32, #tpu.memory_space<vmem>>, vector<64x128xf32>
    tpu.vector_store %arg2[%c0_2, %c0_3], %14 {strides = array<i32>} : memref<64x128xf32, #tpu.memory_space<vmem>>, vector<64x128xf32>,
    return
  }
  func.func @transform_0(%arg0: i32) -> (i32, i32) {
    %c0_i32 = arith.constant 0 : i32
    %c0_i32_0 = arith.constant 0 : i32
    %c0_i32_1 = arith.constant 0 : i32
    return %c0_i32, %c0_i32_0 : i32, i32
  }
  func.func @transform_1(%arg0: i32) -> (i32, i32) {
    %c0_i32 = arith.constant 0 : i32
    %c0_i32_0 = arith.constant 0 : i32
    return %arg0, %c0_i32 : i32, i32
  }
}

</mosaic_0001>

<llo_original>
// kernel: tpu_custom_call.1
$region0: #{tpu_custom_call.1}
  #allocation0 [shape = 'u32[]', space=smem, size = 0x4, offset = 0x4, fixed_abs, tag = 'smem constant byte address 0x4 - core index']
  #allocation1 [shape = 'u32[144,128]{1,0:T(1,128)}', space=vmem, size = 0x12000, scoped, tag = 'internal scratch']
  %s0 = inlined_call_operand.hbm [shape: f32[2,128], index: 0, kind: input, shape index: {}]
  %s1 = inlined_call_operand.hbm [shape: f32[128,128], index: 1, kind: output, shape index: {}]
  %s2 = sld [smem:[#allocation0]]
  $region41: #{tpu_custom_call.1} parent=0
    _
  %s4 = ssub.s32 1, %s2
  %s5 = scalar_select 0, %s4, %s2
  $region1: #{tpu_custom_call.1} parent=0
    #allocation2 [shape = 'u8[1024]{0}', space=vmem, size = 0x400, scoped, tag = 'input window, operand 0, single buffered']
    #allocation3 [shape = 's32[2]{0}', space=sflag, size = 0x8, scoped, tag = 'scoped memory for tpu_custom_call.1']
    #allocation4 [shape = 's32[2]{0}', space=sflag, size = 0x8, scoped, tag = 'scoped memory for tpu_custom_call.1']
    #allocation5 [shape = 'u8[65536]{0}', space=vmem, size = 0x10000, scoped, tag = 'output window, operand 0']
    %6 = vsyncpa [#allocation3], 0
    %7 = vsyncpa [#allocation4], 0
    %s8 = scalar_lea.sflag [#allocation4], 1
    %9 = vsyncpa %s8, 0
    loop: start=0, step=1, limit=4
    $region2: #{tpu_custom_call.1} parent=1 // loop_pre_header
      _
    $region3: #{tpu_custom_call.1} parent=1 // loop_header
      %s11 = sphi 0, %s15
      %p12 = scmp.ge.s32.totalorder %s11, 4
      %s19 = sphi 0, %s19
      %s21 = sphi 0, %s19
      %s22 = sphi 0, %s21
      %s36 = sphi 0, %s22
      %s42 = sphi 0, %s44
      %s45 = sphi 0, %s42
      %s46 = sphi 0, %s45
      %s62 = sphi 0, %s46
    $region4: #{tpu_custom_call.1} parent=1 // loop_header_branch
      %14 = sbr.rel (%p12) target = $region8
    $region5: #{tpu_custom_call.1} parent=1 // loop_body
      %s16 = ssub.s32 %s11, 1
      %s17 = ssub.s32 %s11, 2
      %s18 = sadd.s32 %s11, 1
      %s20 = sadd.s32 %s19, 1
      %p23 = scmp.eq.s32.totalorder %s11, 1
      %p24 = scmp.ne.s32.totalorder %s19, %s21
      %p25 = scmp.eq.s32.totalorder %s11, 0
      %p26 = por %p24, %p25
      %p27 = scmp.ne.s32.totalorder %s19, %s21
      %p28 = scmp.eq.s32.totalorder %s16, 1
      %p29 = por %p27, %p28
      %p30 = scmp.ne.s32.totalorder %s21, %s22
      %p31 = scmp.eq.s32.totalorder %s16, 0
      %p32 = por %p30, %p31
      %p33 = scmp.ne.s32.totalorder %s21, %s22
      %p34 = scmp.eq.s32.totalorder %s17, 1
      %p35 = por %p33, %p34
      %p37 = scmp.ne.s32.totalorder %s22, %s36
      %p38 = scmp.eq.s32.totalorder %s17, 0
      %p39 = por %p37, %p38
      %s40 = ssub.s32 %s11, %s18
      %p41 = scmp.eq.s32.totalorder %s40, 0
      %s43 = sadd.s32 %s42, 1
      %s44 = scalar_select %p41, %s42, %s43
      %p47 = pneg %p41
      %p48 = scmp.eq.s32.totalorder %s11, 1
      %p49 = por %p47, %p48
      %p50 = scmp.ne.s32.totalorder %s42, %s45
      %p51 = scmp.eq.s32.totalorder %s11, 0
      %p52 = por %p50, %p51
      %p53 = scmp.ne.s32.totalorder %s42, %s45
      %p54 = scmp.eq.s32.totalorder %s16, 1
      %p55 = por %p53, %p54
      %p56 = scmp.ne.s32.totalorder %s45, %s46
      %p57 = scmp.eq.s32.totalorder %s16, 0
      %p58 = por %p56, %p57
      %p59 = scmp.ne.s32.totalorder %s45, %s46
      %p60 = scmp.eq.s32.totalorder %s17, 1
      %p61 = por %p59, %p60
      %p63 = scmp.ne.s32.totalorder %s46, %s62
      %p64 = scmp.eq.s32.totalorder %s17, 0
      %p65 = por %p63, %p64
      %p66 = scmp.le.s32.totalorder 1, %s11
      %p67 = scmp.lt.s32.totalorder %s11, 3
      %p68 = pnand %p66, %p67
      %p69 = pneg %p68
      // Predicated region
      $region9: #{tpu_custom_call.1} parent=5 // pred_check
        _
      $region10: #{tpu_custom_call.1} parent=5 // pred_check_branch
        %71 = sbr.rel (%p68) target = $region12
      $region11: #{tpu_custom_call.1} parent=5 // pred_region
        %s72 = ssub.s32 %s11, 1
        // Predicated region
        $region13: #{tpu_custom_call.1} parent=11 // pred_check
          %p73 = pneg %p32
        $region14: #{tpu_custom_call.1} parent=11 // pred_check_branch
          %75 = sbr.rel (%p73) target = $region16
        $region15: #{tpu_custom_call.1} parent=11 // pred_region
          %s77 = ssub.s32 32, 32
          %78 = vsyncadd [#allocation3], %s77
          %s80 = sshll.u32 [#allocation2], 4
          %s81 = int_to_ptr.vmem [resolvable:$true] %s80
          %83 = dma.hbm_to_vmem [thread:$0]  %s0, 32, %s81, [#allocation3]
        $region16: #{tpu_custom_call.1} parent=11 // pred_fallthru
          _
      $region12: #{tpu_custom_call.1} parent=5 // pred_fallthru
        _
      %p84 = scmp.lt.s32.totalorder %s11, 2
      // Predicated region
      $region17: #{tpu_custom_call.1} parent=5 // pred_check
        %p85 = pneg %p84
      $region18: #{tpu_custom_call.1} parent=5 // pred_check_branch
        %87 = sbr.rel (%p85) target = $region20
      $region19: #{tpu_custom_call.1} parent=5 // pred_region
        _
      $region20: #{tpu_custom_call.1} parent=5 // pred_fallthru
        _
      %p88 = scmp.le.s32.totalorder 1, %s11
      %p89 = scmp.lt.s32.totalorder %s11, 3
      %p90 = pnand %p88, %p89
      %p91 = pneg %p90
      // Predicated region
      $region21: #{tpu_custom_call.1} parent=5 // pred_check
        _
      $region22: #{tpu_custom_call.1} parent=5 // pred_check_branch
        %93 = sbr.rel (%p90) target = $region24
      $region23: #{tpu_custom_call.1} parent=5 // pred_region
        %s94 = ssub.s32 %s11, 1
        // Predicated region
        $region25: #{tpu_custom_call.1} parent=23 // pred_check
          %p95 = pneg %p32
        $region26: #{tpu_custom_call.1} parent=23 // pred_check_branch
          %97 = sbr.rel (%p95) target = $region28
        $region27: #{tpu_custom_call.1} parent=23 // pred_region
          %98 = dma.done [#allocation3], 32
        $region28: #{tpu_custom_call.1} parent=23 // pred_fallthru
          _
        %p99 = pneg %p32
        %p100 = pneg %p29
        %p101 = pneg %p58
        %p102 = pneg %p55
        %s103 = sand.u32 %s45, 1
        %s104 = scalar_lea.sflag [#allocation4], %s103
        %s105 = sand.u32 %s45, 1
        %s106 = smul.addr %s105, 64
        %s107 = scalar_lea.vmem [#allocation5], %s106
        %s108 = smul.u32 8, %s16
        %s109 = smul.u32 %s16, 64
        %v110 = vld [vmem:[#allocation2] sm:$0x1]
        %v111 = vld [vmem:[#allocation2 + $0x1] sm:$0x1]
        %s112 = scvt.s32.f32 %s109
        %v113 = vstv %s112
        %v114 = vmul.f32 %v113, %v110
        %v115 = vadd.f32 %v111, %v114
        %v116 = vlaneseq
        %v117 = vshrl.u32 %v116, 7
        %v118 = vadd.s32 %v117, 8
        %v119 = vadd.s32 %v117, 16
        %v120 = vadd.s32 %v117, 24
        %v121 = vadd.s32 %v117, 32
        %v122 = vadd.s32 %v117, 40
        %v123 = vadd.s32 %v117, 48
        %v124 = vadd.s32 %v117, 56
        %v125 = vcvt.s32.f32 %v117
        %v126 = vcvt.s32.f32 %v118
        %v127 = vcvt.s32.f32 %v119
        %v128 = vcvt.s32.f32 %v120
        %v129 = vcvt.s32.f32 %v121
        %v130 = vcvt.s32.f32 %v122
        %v131 = vcvt.s32.f32 %v123
        %v132 = vcvt.s32.f32 %v124
        %v133 = vlaneseq
        %v134 = vshrl.u32 %v133, 7
        %v135 = vsub.s32 0, %v134
        %v136 = vrot.slane %v110, %v135
        %v137 = vmul.f32 %v125, %v136
        %v138 = vmul.f32 %v126, %v136
        %v139 = vmul.f32 %v127, %v136
        %v140 = vmul.f32 %v128, %v136
        %v141 = vmul.f32 %v129, %v136
        %v142 = vmul.f32 %v130, %v136
        %v143 = vmul.f32 %v131, %v136
        %v144 = vmul.f32 %v132, %v136
        %v145 = vlaneseq
        %v146 = vshrl.u32 %v145, 7
        %v147 = vsub.s32 0, %v146
        %v148 = vrot.slane %v115, %v147
        %v149 = vadd.f32 %v137, %v148
        %v150 = vadd.f32 %v138, %v148
        %v151 = vadd.f32 %v139, %v148
        %v152 = vadd.f32 %v140, %v148
        %v153 = vadd.f32 %v141, %v148
        %v154 = vadd.f32 %v142, %v148
        %v155 = vadd.f32 %v143, %v148
        %v156 = vadd.f32 %v144, %v148
        %v157 = vand.u32 2147483647, %v149
        %vm158 = vcmp.le.f32.partialorder %v157, 0.7853982
        %vm159 = vcmp.lt.s32.totalorder %v149, 0
        %v160 = vand.u32 %v149, 2139095040
        %v161 = vshrl.u32 %v160, 23
        %v162 = vsub.s32 %v161, 127
        %v163 = vand.u32 2147483647, %v149
        %v164 = vand.u32 %v163, 8388607
        %v165 = vor.u32 %v164, 8388608
        %v166 = vsub.s32 0, %v165
        %v167 = vadd.s32 %v162, 1
        %vm168 = vcmp.gt.s32.totalorder %v167, 0
        %v169 = vsel %vm168, %v167, 0
        %v170 = vshrl.u32 %v169, 5
        %v171 = vand.u32 %v169, 31
        %v172 = vsub.s32 32, %v171
        %v173 = vshrl.u32 683565275, %v172
        %v174 = vshll.u32 683565275, %v171
        %v175 = vshrl.u32 2475754826, %v172
        %v176 = vor.u32 %v174, %v175
        %v177 = vshll.u32 2475754826, %v171
        %v178 = vshrl.u32 2131351028, %v172
        %v179 = vor.u32 %v177, %v178
        %v180 = vshll.u32 2131351028, %v171
        %v181 = vshrl.u32 2102212464, %v172
        %v182 = vor.u32 %v180, %v181
        %v183 = vshll.u32 2102212464, %v171
        %v184 = vshrl.u32 920167782, %v172
        %v185 = vor.u32 %v183, %v184
        %v186 = vshll.u32 920167782, %v171
        %v187 = vshrl.u32 1326507024, %v172
        %v188 = vor.u32 %v186, %v187
        %vm189 = vcmp.lt.s32.totalorder %v170, 1
        %vm190 = vcmp.lt.s32.totalorder %v170, 2
        %vm191 = vcmp.lt.s32.totalorder %v170, 3
        %vm192 = vcmp.lt.s32.totalorder %v170, 4
        %v193 = vsel %vm189, %v173, %v176
        %v194 = vsel %vm192, %v182, 2102212464
        %v195 = vsel %vm191, %v179, %v194
        %v196 = vsel %vm190, %v193, %v195
        %v197 = vsel %vm189, %v176, %v179
        %v198 = vsel %vm192, %v185, 920167782
        %v199 = vsel %vm191, %v182, %v198
        %v200 = vsel %vm190, %v197, %v199
        %v201 = vsel %vm189, %v179, %v182
        %v202 = vsel %vm192, %v188, 1326507024
        %v203 = vsel %vm191, %v185, %v202
        %v204 = vsel %vm190, %v201, %v203
        %v205 = vshll.u32 %v165, 8
        %v206 = vmul.u32.u64.compose %v205, %v204
        %v207 = vextract.low.u32 %v206
        %v208 = vextract.high.u32 %v206
        %v209 = vmul.u32.u64.compose %v205, %v200
        %v210 = vextract.low.u32 %v209
        %v211 = vextract.high.u32 %v209
        %v212 = vmul.u32 %v205, %v196
        %v213 = vadd.s32 %v208, %v210
        %vm214 = vc.u32 %v208, %v210
        %v215 = vadd.s32 %v211, 1
        %v216 = vsel %vm214, %v215, %v211
        %v217 = vadd.s32 %v212, %v216
        %v218 = vadd.s32 %v217, 536870912
        %v219 = vshrl.u32 %v218, 30
        %v220 = vshll.u32 %v219, 30
        %v221 = vsub.s32 %v217, %v220
        %vm222 = vcmp.lt.s32.totalorder %v221, 0
        %v223 = vsub.s32 0, %v221
        %v224 = vsel %vm222, %v223, %v221
        %v225 = vclz %v224
        %v226 = vsub.s32 %v225, 2
        %vm227 = vcmp.gt.s32.totalorder 0, %v226
        %v228 = vsel %vm227, 0, %v226
        %v229 = vsub.s32 32, %v228
        %v230 = vshll.u32 %v221, %v228
        %v231 = vshrl.u32 %v213, %v229
        %v232 = vor.u32 %v230, %v231
        %v233 = vsub.s32 4294967266, %v228
        %v234 = vadd.s32 %v233, 127
        %v235 = vshll.u32 %v234, 23
        %v236 = vor.u32 4788187, %v235
        %v237 = vand.u32 2147483647, %v236
        %v239 = vcvt.s32.f32 %v232
        %v240 = vmul.f32 %v239, %v237
        %v241 = vxor.u32 %v240, 2147483648
        %v242 = vsel %vm159, %v241, %v240
        %v243 = vsub.s32 4, %v219
        %v244 = vsel %vm159, %v243, %v219
        %v245 = vsel %vm158, %v149, %v242
        %v246 = vsel %vm158, 0, %v244
        %v247 = vcosq.f32.pop %v245
        %v248 = vsinq.f32.pop %v245
        %vm249 = vweird.f32 %v149
        %v250 = vadd.s32 %v246, 3
        %v251 = vand.u32 %v250, 3
        %vm252 = vcmp.lt.s32.totalorder %v251, 2
        %vm253 = vcmp.eq.s32.totalorder %v251, 0
        %v254 = vxor.u32 %v248, 2147483648
        %v255 = vsel %vm253, %v247, %v254
        %vm256 = vcmp.eq.s32.totalorder %v251, 2
        %v257 = vxor.u32 %v247, 2147483648
        %v258 = vsel %vm256, %v257, %v248
        %v259 = vsel %vm252, %v255, %v258
        %v260 = vsel %vm249, nan, %v259
        %v261 = vand.u32 2147483647, %v150
        %vm262 = vcmp.le.f32.partialorder %v261, 0.7853982
        %vm263 = vcmp.lt.s32.totalorder %v150, 0
        %v264 = vand.u32 %v150, 2139095040
        %v265 = vshrl.u32 %v264, 23
        %v266 = vsub.s32 %v265, 127
        %v267 = vand.u32 2147483647, %v150
        %v268 = vand.u32 %v267, 8388607
        %v269 = vor.u32 %v268, 8388608
        %v270 = vsub.s32 0, %v269
        %v271 = vadd.s32 %v266, 1
        %vm272 = vcmp.gt.s32.totalorder %v271, 0
        %v273 = vsel %vm272, %v271, 0
        %v274 = vshrl.u32 %v273, 5
        %v275 = vand.u32 %v273, 31
        %v276 = vsub.s32 32, %v275
        %v277 = vshrl.u32 683565275, %v276
        %v278 = vshll.u32 683565275, %v275
        %v279 = vshrl.u32 2475754826, %v276
        %v280 = vor.u32 %v278, %v279
        %v281 = vshll.u32 2475754826, %v275
        %v282 = vshrl.u32 2131351028, %v276
        %v283 = vor.u32 %v281, %v282
        %v284 = vshll.u32 2131351028, %v275
        %v285 = vshrl.u32 2102212464, %v276
        %v286 = vor.u32 %v284, %v285
        %v287 = vshll.u32 2102212464, %v275
        %v288 = vshrl.u32 920167782, %v276
        %v289 = vor.u32 %v287, %v288
        %v290 = vshll.u32 920167782, %v275
        %v291 = vshrl.u32 1326507024, %v276
        %v292 = vor.u32 %v290, %v291
        %vm293 = vcmp.lt.s32.totalorder %v274, 1
        %vm294 = vcmp.lt.s32.totalorder %v274, 2
        %vm295 = vcmp.lt.s32.totalorder %v274, 3
        %vm296 = vcmp.lt.s32.totalorder %v274, 4
        %v297 = vsel %vm293, %v277, %v280
        %v298 = vsel %vm296, %v286, 2102212464
        %v299 = vsel %vm295, %v283, %v298
        %v300 = vsel %vm294, %v297, %v299
        %v301 = vsel %vm293, %v280, %v283
        %v302 = vsel %vm296, %v289, 920167782
        %v303 = vsel %vm295, %v286, %v302
        %v304 = vsel %vm294, %v301, %v303
        %v305 = vsel %vm293, %v283, %v286
        %v306 = vsel %vm296, %v292, 1326507024
        %v307 = vsel %vm295, %v289, %v306
        %v308 = vsel %vm294, %v305, %v307
        %v309 = vshll.u32 %v269, 8
        %v310 = vmul.u32.u64.compose %v309, %v308
        %v311 = vextract.low.u32 %v310
        %v312 = vextract.high.u32 %v310
        %v313 = vmul.u32.u64.compose %v309, %v304
        %v314 = vextract.low.u32 %v313
        %v315 = vextract.high.u32 %v313
        %v316 = vmul.u32 %v309, %v300
        %v317 = vadd.s32 %v312, %v314
        %vm318 = vc.u32 %v312, %v314
        %v319 = vadd.s32 %v315, 1
        %v320 = vsel %vm318, %v319, %v315
        %v321 = vadd.s32 %v316, %v320
        %v322 = vadd.s32 %v321, 536870912
        %v323 = vshrl.u32 %v322, 30
        %v324 = vshll.u32 %v323, 30
        %v325 = vsub.s32 %v321, %v324
        %vm326 = vcmp.lt.s32.totalorder %v325, 0
        %v327 = vsub.s32 0, %v325
        %v328 = vsel %vm326, %v327, %v325
        %v329 = vclz %v328
        %v330 = vsub.s32 %v329, 2
        %vm331 = vcmp.gt.s32.totalorder 0, %v330
        %v332 = vsel %vm331, 0, %v330
        %v333 = vsub.s32 32, %v332
        %v334 = vshll.u32 %v325, %v332
        %v335 = vshrl.u32 %v317, %v333
        %v336 = vor.u32 %v334, %v335
        %v337 = vsub.s32 4294967266, %v332
        %v338 = vadd.s32 %v337, 127
        %v339 = vshll.u32 %v338, 23
        %v340 = vor.u32 4788187, %v339
        %v341 = vand.u32 2147483647, %v340
        %v343 = vcvt.s32.f32 %v336
        %v344 = vmul.f32 %v343, %v341
        %v345 = vxor.u32 %v344, 2147483648
        %v346 = vsel %vm263, %v345, %v344
        %v347 = vsub.s32 4, %v323
        %v348 = vsel %vm263, %v347, %v323
        %v349 = vsel %vm262, %v150, %v346
        %v350 = vsel %vm262, 0, %v348
        %v351 = vcosq.f32.pop %v349
        %v352 = vsinq.f32.pop %v349
        %vm353 = vweird.f32 %v150
        %v354 = vadd.s32 %v350, 3
        %v355 = vand.u32 %v354, 3
        %vm356 = vcmp.lt.s32.totalorder %v355, 2
        %vm357 = vcmp.eq.s32.totalorder %v355, 0
        %v358 = vxor.u32 %v352, 2147483648
        %v359 = vsel %vm357, %v351, %v358
        %vm360 = vcmp.eq.s32.totalorder %v355, 2
        %v361 = vxor.u32 %v351, 2147483648
        %v362 = vsel %vm360, %v361, %v352
        %v363 = vsel %vm356, %v359, %v362
        %v364 = vsel %vm353, nan, %v363
        %v365 = vand.u32 2147483647, %v151
        %vm366 = vcmp.le.f32.partialorder %v365, 0.7853982
        %vm367 = vcmp.lt.s32.totalorder %v151, 0
        %v368 = vand.u32 %v151, 2139095040
        %v369 = vshrl.u32 %v368, 23
        %v370 = vsub.s32 %v369, 127
        %v371 = vand.u32 2147483647, %v151
        %v372 = vand.u32 %v371, 8388607
        %v373 = vor.u32 %v372, 8388608
        %v374 = vsub.s32 0, %v373
        %v375 = vadd.s32 %v370, 1
        %vm376 = vcmp.gt.s32.totalorder %v375, 0
        %v377 = vsel %vm376, %v375, 0
        %v378 = vshrl.u32 %v377, 5
        %v379 = vand.u32 %v377, 31
        %v380 = vsub.s32 32, %v379
        %v381 = vshrl.u32 683565275, %v380
        %v382 = vshll.u32 683565275, %v379
        %v383 = vshrl.u32 2475754826, %v380
        %v384 = vor.u32 %v382, %v383
        %v385 = vshll.u32 2475754826, %v379
        %v386 = vshrl.u32 2131351028, %v380
        %v387 = vor.u32 %v385, %v386
        %v388 = vshll.u32 2131351028, %v379
        %v389 = vshrl.u32 2102212464, %v380
        %v390 = vor.u32 %v388, %v389
        %v391 = vshll.u32 2102212464, %v379
        %v392 = vshrl.u32 920167782, %v380
        %v393 = vor.u32 %v391, %v392
        %v394 = vshll.u32 920167782, %v379
        %v395 = vshrl.u32 1326507024, %v380
        %v396 = vor.u32 %v394, %v395
        %vm397 = vcmp.lt.s32.totalorder %v378, 1
        %vm398 = vcmp.lt.s32.totalorder %v378, 2
        %vm399 = vcmp.lt.s32.totalorder %v378, 3
        %vm400 = vcmp.lt.s32.totalorder %v378, 4
        %v401 = vsel %vm397, %v381, %v384
        %v402 = vsel %vm400, %v390, 2102212464
        %v403 = vsel %vm399, %v387, %v402
        %v404 = vsel %vm398, %v401, %v403
        %v405 = vsel %vm397, %v384, %v387
        %v406 = vsel %vm400, %v393, 920167782
        %v407 = vsel %vm399, %v390, %v406
        %v408 = vsel %vm398, %v405, %v407
        %v409 = vsel %vm397, %v387, %v390
        %v410 = vsel %vm400, %v396, 1326507024
        %v411 = vsel %vm399, %v393, %v410
        %v412 = vsel %vm398, %v409, %v411
        %v413 = vshll.u32 %v373, 8
        %v414 = vmul.u32.u64.compose %v413, %v412
        %v415 = vextract.low.u32 %v414
        %v416 = vextract.high.u32 %v414
        %v417 = vmul.u32.u64.compose %v413, %v408
        %v418 = vextract.low.u32 %v417
        %v419 = vextract.high.u32 %v417
        %v420 = vmul.u32 %v413, %v404
        %v421 = vadd.s32 %v416, %v418
        %vm422 = vc.u32 %v416, %v418
        %v423 = vadd.s32 %v419, 1
        %v424 = vsel %vm422, %v423, %v419
        %v425 = vadd.s32 %v420, %v424
        %v426 = vadd.s32 %v425, 536870912
        %v427 = vshrl.u32 %v426, 30
        %v428 = vshll.u32 %v427, 30
        %v429 = vsub.s32 %v425, %v428
        %vm430 = vcmp.lt.s32.totalorder %v429, 0
        %v431 = vsub.s32 0, %v429
        %v432 = vsel %vm430, %v431, %v429
        %v433 = vclz %v432
        %v434 = vsub.s32 %v433, 2
        %vm435 = vcmp.gt.s32.totalorder 0, %v434
        %v436 = vsel %vm435, 0, %v434
        %v437 = vsub.s32 32, %v436
        %v438 = vshll.u32 %v429, %v436
        %v439 = vshrl.u32 %v421, %v437
        %v440 = vor.u32 %v438, %v439
        %v441 = vsub.s32 4294967266, %v436
        %v442 = vadd.s32 %v441, 127
        %v443 = vshll.u32 %v442, 23
        %v444 = vor.u32 4788187, %v443
        %v445 = vand.u32 2147483647, %v444
        %v447 = vcvt.s32.f32 %v440
        %v448 = vmul.f32 %v447, %v445
        %v449 = vxor.u32 %v448, 2147483648
        %v450 = vsel %vm367, %v449, %v448
        %v451 = vsub.s32 4, %v427
        %v452 = vsel %vm367, %v451, %v427
        %v453 = vsel %vm366, %v151, %v450
        %v454 = vsel %vm366, 0, %v452
        %v455 = vcosq.f32.pop %v453
        %v456 = vsinq.f32.pop %v453
        %vm457 = vweird.f32 %v151
        %v458 = vadd.s32 %v454, 3
        %v459 = vand.u32 %v458, 3
        %vm460 = vcmp.lt.s32.totalorder %v459, 2
        %vm461 = vcmp.eq.s32.totalorder %v459, 0
        %v462 = vxor.u32 %v456, 2147483648
        %v463 = vsel %vm461, %v455, %v462
        %vm464 = vcmp.eq.s32.totalorder %v459, 2
        %v465 = vxor.u32 %v455, 2147483648
        %v466 = vsel %vm464, %v465, %v456
        %v467 = vsel %vm460, %v463, %v466
        %v468 = vsel %vm457, nan, %v467
        %v469 = vand.u32 2147483647, %v152
        %vm470 = vcmp.le.f32.partialorder %v469, 0.7853982
        %vm471 = vcmp.lt.s32.totalorder %v152, 0
        %v472 = vand.u32 %v152, 2139095040
        %v473 = vshrl.u32 %v472, 23
        %v474 = vsub.s32 %v473, 127
        %v475 = vand.u32 2147483647, %v152
        %v476 = vand.u32 %v475, 8388607
        %v477 = vor.u32 %v476, 8388608
        %v478 = vsub.s32 0, %v477
        %v479 = vadd.s32 %v474, 1
        %vm480 = vcmp.gt.s32.totalorder %v479, 0
        %v481 = vsel %vm480, %v479, 0
        %v482 = vshrl.u32 %v481, 5
        %v483 = vand.u32 %v481, 31
        %v484 = vsub.s32 32, %v483
        %v485 = vshrl.u32 683565275, %v484
        %v486 = vshll.u32 683565275, %v483
        %v487 = vshrl.u32 2475754826, %v484
        %v488 = vor.u32 %v486, %v487
        %v489 = vshll.u32 2475754826, %v483
        %v490 = vshrl.u32 2131351028, %v484
        %v491 = vor.u32 %v489, %v490
        %v492 = vshll.u32 2131351028, %v483
        %v493 = vshrl.u32 2102212464, %v484
        %v494 = vor.u32 %v492, %v493
        %v495 = vshll.u32 2102212464, %v483
        %v496 = vshrl.u32 920167782, %v484
        %v497 = vor.u32 %v495, %v496
        %v498 = vshll.u32 920167782, %v483
        %v499 = vshrl.u32 1326507024, %v484
        %v500 = vor.u32 %v498, %v499
        %vm501 = vcmp.lt.s32.totalorder %v482, 1
        %vm502 = vcmp.lt.s32.totalorder %v482, 2
        %vm503 = vcmp.lt.s32.totalorder %v482, 3
        %vm504 = vcmp.lt.s32.totalorder %v482, 4
        %v505 = vsel %vm501, %v485, %v488
        %v506 = vsel %vm504, %v494, 2102212464
        %v507 = vsel %vm503, %v491, %v506
        %v508 = vsel %vm502, %v505, %v507
        %v509 = vsel %vm501, %v488, %v491
        %v510 = vsel %vm504, %v497, 920167782
        %v511 = vsel %vm503, %v494, %v510
        %v512 = vsel %vm502, %v509, %v511
        %v513 = vsel %vm501, %v491, %v494
        %v514 = vsel %vm504, %v500, 1326507024
        %v515 = vsel %vm503, %v497, %v514
        %v516 = vsel %vm502, %v513, %v515
        %v517 = vshll.u32 %v477, 8
        %v518 = vmul.u32.u64.compose %v517, %v516
        %v519 = vextract.low.u32 %v518
        %v520 = vextract.high.u32 %v518
        %v521 = vmul.u32.u64.compose %v517, %v512
        %v522 = vextract.low.u32 %v521
        %v523 = vextract.high.u32 %v521
        %v524 = vmul.u32 %v517, %v508
        %v525 = vadd.s32 %v520, %v522
        %vm526 = vc.u32 %v520, %v522
        %v527 = vadd.s32 %v523, 1
        %v528 = vsel %vm526, %v527, %v523
        %v529 = vadd.s32 %v524, %v528
        %v530 = vadd.s32 %v529, 536870912
        %v531 = vshrl.u32 %v530, 30
        %v532 = vshll.u32 %v531, 30
        %v533 = vsub.s32 %v529, %v532
        %vm534 = vcmp.lt.s32.totalorder %v533, 0
        %v535 = vsub.s32 0, %v533
        %v536 = vsel %vm534, %v535, %v533
        %v537 = vclz %v536
        %v538 = vsub.s32 %v537, 2
        %vm539 = vcmp.gt.s32.totalorder 0, %v538
        %v540 = vsel %vm539, 0, %v538
        %v541 = vsub.s32 32, %v540
        %v542 = vshll.u32 %v533, %v540
        %v543 = vshrl.u32 %v525, %v541
        %v544 = vor.u32 %v542, %v543
        %v545 = vsub.s32 4294967266, %v540
        %v546 = vadd.s32 %v545, 127
        %v547 = vshll.u32 %v546, 23
        %v548 = vor.u32 4788187, %v547
        %v549 = vand.u32 2147483647, %v548
        %v551 = vcvt.s32.f32 %v544
        %v552 = vmul.f32 %v551, %v549
        %v553 = vxor.u32 %v552, 2147483648
        %v554 = vsel %vm471, %v553, %v552
        %v555 = vsub.s32 4, %v531
        %v556 = vsel %vm471, %v555, %v531
        %v557 = vsel %vm470, %v152, %v554
        %v558 = vsel %vm470, 0, %v556
        %v559 = vcosq.f32.pop %v557
        %v560 = vsinq.f32.pop %v557
        %vm561 = vweird.f32 %v152
        %v562 = vadd.s32 %v558, 3
        %v563 = vand.u32 %v562, 3
        %vm564 = vcmp.lt.s32.totalorder %v563, 2
        %vm565 = vcmp.eq.s32.totalorder %v563, 0
        %v566 = vxor.u32 %v560, 2147483648
        %v567 = vsel %vm565, %v559, %v566
        %vm568 = vcmp.eq.s32.totalorder %v563, 2
        %v569 = vxor.u32 %v559, 2147483648
        %v570 = vsel %vm568, %v569, %v560
        %v571 = vsel %vm564, %v567, %v570
        %v572 = vsel %vm561, nan, %v571
        %v573 = vand.u32 2147483647, %v153
        %vm574 = vcmp.le.f32.partialorder %v573, 0.7853982
        %vm575 = vcmp.lt.s32.totalorder %v153, 0
        %v576 = vand.u32 %v153, 2139095040
        %v577 = vshrl.u32 %v576, 23
        %v578 = vsub.s32 %v577, 127
        %v579 = vand.u32 2147483647, %v153
        %v580 = vand.u32 %v579, 8388607
        %v581 = vor.u32 %v580, 8388608
        %v582 = vsub.s32 0, %v581
        %v583 = vadd.s32 %v578, 1
        %vm584 = vcmp.gt.s32.totalorder %v583, 0
        %v585 = vsel %vm584, %v583, 0
        %v586 = vshrl.u32 %v585, 5
        %v587 = vand.u32 %v585, 31
        %v588 = vsub.s32 32, %v587
        %v589 = vshrl.u32 683565275, %v588
        %v590 = vshll.u32 683565275, %v587
        %v591 = vshrl.u32 2475754826, %v588
        %v592 = vor.u32 %v590, %v591
        %v593 = vshll.u32 2475754826, %v587
        %v594 = vshrl.u32 2131351028, %v588
        %v595 = vor.u32 %v593, %v594
        %v596 = vshll.u32 2131351028, %v587
        %v597 = vshrl.u32 2102212464, %v588
        %v598 = vor.u32 %v596, %v597
        %v599 = vshll.u32 2102212464, %v587
        %v600 = vshrl.u32 920167782, %v588
        %v601 = vor.u32 %v599, %v600
        %v602 = vshll.u32 920167782, %v587
        %v603 = vshrl.u32 1326507024, %v588
        %v604 = vor.u32 %v602, %v603
        %vm605 = vcmp.lt.s32.totalorder %v586, 1
        %vm606 = vcmp.lt.s32.totalorder %v586, 2
        %vm607 = vcmp.lt.s32.totalorder %v586, 3
        %vm608 = vcmp.lt.s32.totalorder %v586, 4
        %v609 = vsel %vm605, %v589, %v592
        %v610 = vsel %vm608, %v598, 2102212464
        %v611 = vsel %vm607, %v595, %v610
        %v612 = vsel %vm606, %v609, %v611
        %v613 = vsel %vm605, %v592, %v595
        %v614 = vsel %vm608, %v601, 920167782
        %v615 = vsel %vm607, %v598, %v614
        %v616 = vsel %vm606, %v613, %v615
        %v617 = vsel %vm605, %v595, %v598
        %v618 = vsel %vm608, %v604, 1326507024
        %v619 = vsel %vm607, %v601, %v618
        %v620 = vsel %vm606, %v617, %v619
        %v621 = vshll.u32 %v581, 8
        %v622 = vmul.u32.u64.compose %v621, %v620
        %v623 = vextract.low.u32 %v622
        %v624 = vextract.high.u32 %v622
        %v625 = vmul.u32.u64.compose %v621, %v616
        %v626 = vextract.low.u32 %v625
        %v627 = vextract.high.u32 %v625
        %v628 = vmul.u32 %v621, %v612
        %v629 = vadd.s32 %v624, %v626
        %vm630 = vc.u32 %v624, %v626
        %v631 = vadd.s32 %v627, 1
        %v632 = vsel %vm630, %v631, %v627
        %v633 = vadd.s32 %v628, %v632
        %v634 = vadd.s32 %v633, 536870912
        %v635 = vshrl.u32 %v634, 30
        %v636 = vshll.u32 %v635, 30
        %v637 = vsub.s32 %v633, %v636
        %vm638 = vcmp.lt.s32.totalorder %v637, 0
        %v639 = vsub.s32 0, %v637
        %v640 = vsel %vm638, %v639, %v637
        %v641 = vclz %v640
        %v642 = vsub.s32 %v641, 2
        %vm643 = vcmp.gt.s32.totalorder 0, %v642
        %v644 = vsel %vm643, 0, %v642
        %v645 = vsub.s32 32, %v644
        %v646 = vshll.u32 %v637, %v644
        %v647 = vshrl.u32 %v629, %v645
        %v648 = vor.u32 %v646, %v647
        %v649 = vsub.s32 4294967266, %v644
        %v650 = vadd.s32 %v649, 127
        %v651 = vshll.u32 %v650, 23
        %v652 = vor.u32 4788187, %v651
        %v653 = vand.u32 2147483647, %v652
        %v655 = vcvt.s32.f32 %v648
        %v656 = vmul.f32 %v655, %v653
        %v657 = vxor.u32 %v656, 2147483648
        %v658 = vsel %vm575, %v657, %v656
        %v659 = vsub.s32 4, %v635
        %v660 = vsel %vm575, %v659, %v635
        %v661 = vsel %vm574, %v153, %v658
        %v662 = vsel %vm574, 0, %v660
        %v663 = vcosq.f32.pop %v661
        %v664 = vsinq.f32.pop %v661
        %vm665 = vweird.f32 %v153
        %v666 = vadd.s32 %v662, 3
        %v667 = vand.u32 %v666, 3
        %vm668 = vcmp.lt.s32.totalorder %v667, 2
        %vm669 = vcmp.eq.s32.totalorder %v667, 0
        %v670 = vxor.u32 %v664, 2147483648
        %v671 = vsel %vm669, %v663, %v670
        %vm672 = vcmp.eq.s32.totalorder %v667, 2
        %v673 = vxor.u32 %v663, 2147483648
        %v674 = vsel %vm672, %v673, %v664
        %v675 = vsel %vm668, %v671, %v674
        %v676 = vsel %vm665, nan, %v675
        %v677 = vand.u32 2147483647, %v154
        %vm678 = vcmp.le.f32.partialorder %v677, 0.7853982
        %vm679 = vcmp.lt.s32.totalorder %v154, 0
        %v680 = vand.u32 %v154, 2139095040
        %v681 = vshrl.u32 %v680, 23
        %v682 = vsub.s32 %v681, 127
        %v683 = vand.u32 2147483647, %v154
        %v684 = vand.u32 %v683, 8388607
        %v685 = vor.u32 %v684, 8388608
        %v686 = vsub.s32 0, %v685
        %v687 = vadd.s32 %v682, 1
        %vm688 = vcmp.gt.s32.totalorder %v687, 0
        %v689 = vsel %vm688, %v687, 0
        %v690 = vshrl.u32 %v689, 5
        %v691 = vand.u32 %v689, 31
        %v692 = vsub.s32 32, %v691
        %v693 = vshrl.u32 683565275, %v692
        %v694 = vshll.u32 683565275, %v691
        %v695 = vshrl.u32 2475754826, %v692
        %v696 = vor.u32 %v694, %v695
        %v697 = vshll.u32 2475754826, %v691
        %v698 = vshrl.u32 2131351028, %v692
        %v699 = vor.u32 %v697, %v698
        %v700 = vshll.u32 2131351028, %v691
        %v701 = vshrl.u32 2102212464, %v692
        %v702 = vor.u32 %v700, %v701
        %v703 = vshll.u32 2102212464, %v691
        %v704 = vshrl.u32 920167782, %v692
        %v705 = vor.u32 %v703, %v704
        %v706 = vshll.u32 920167782, %v691
        %v707 = vshrl.u32 1326507024, %v692
        %v708 = vor.u32 %v706, %v707
        %vm709 = vcmp.lt.s32.totalorder %v690, 1
        %vm710 = vcmp.lt.s32.totalorder %v690, 2
        %vm711 = vcmp.lt.s32.totalorder %v690, 3
        %vm712 = vcmp.lt.s32.totalorder %v690, 4
        %v713 = vsel %vm709, %v693, %v696
        %v714 = vsel %vm712, %v702, 2102212464
        %v715 = vsel %vm711, %v699, %v714
        %v716 = vsel %vm710, %v713, %v715
        %v717 = vsel %vm709, %v696, %v699
        %v718 = vsel %vm712, %v705, 920167782
        %v719 = vsel %vm711, %v702, %v718
        %v720 = vsel %vm710, %v717, %v719
        %v721 = vsel %vm709, %v699, %v702
        %v722 = vsel %vm712, %v708, 1326507024
        %v723 = vsel %vm711, %v705, %v722
        %v724 = vsel %vm710, %v721, %v723
        %v725 = vshll.u32 %v685, 8
        %v726 = vmul.u32.u64.compose %v725, %v724
        %v727 = vextract.low.u32 %v726
        %v728 = vextract.high.u32 %v726
        %v729 = vmul.u32.u64.compose %v725, %v720
        %v730 = vextract.low.u32 %v729
        %v731 = vextract.high.u32 %v729
        %v732 = vmul.u32 %v725, %v716
        %v733 = vadd.s32 %v728, %v730
        %vm734 = vc.u32 %v728, %v730
        %v735 = vadd.s32 %v731, 1
        %v736 = vsel %vm734, %v735, %v731
        %v737 = vadd.s32 %v732, %v736
        %v738 = vadd.s32 %v737, 536870912
        %v739 = vshrl.u32 %v738, 30
        %v740 = vshll.u32 %v739, 30
        %v741 = vsub.s32 %v737, %v740
        %vm742 = vcmp.lt.s32.totalorder %v741, 0
        %v743 = vsub.s32 0, %v741
        %v744 = vsel %vm742, %v743, %v741
        %v745 = vclz %v744
        %v746 = vsub.s32 %v745, 2
        %vm747 = vcmp.gt.s32.totalorder 0, %v746
        %v748 = vsel %vm747, 0, %v746
        %v749 = vsub.s32 32, %v748
        %v750 = vshll.u32 %v741, %v748
        %v751 = vshrl.u32 %v733, %v749
        %v752 = vor.u32 %v750, %v751
        %v753 = vsub.s32 4294967266, %v748
        %v754 = vadd.s32 %v753, 127
        %v755 = vshll.u32 %v754, 23
        %v756 = vor.u32 4788187, %v755
        %v757 = vand.u32 2147483647, %v756
        %v759 = vcvt.s32.f32 %v752
        %v760 = vmul.f32 %v759, %v757
        %v761 = vxor.u32 %v760, 2147483648
        %v762 = vsel %vm679, %v761, %v760
        %v763 = vsub.s32 4, %v739
        %v764 = vsel %vm679, %v763, %v739
        %v765 = vsel %vm678, %v154, %v762
        %v766 = vsel %vm678, 0, %v764
        %v767 = vcosq.f32.pop %v765
        %v768 = vsinq.f32.pop %v765
        %vm769 = vweird.f32 %v154
        %v770 = vadd.s32 %v766, 3
        %v771 = vand.u32 %v770, 3
        %vm772 = vcmp.lt.s32.totalorder %v771, 2
        %vm773 = vcmp.eq.s32.totalorder %v771, 0
        %v774 = vxor.u32 %v768, 2147483648
        %v775 = vsel %vm773, %v767, %v774
        %vm776 = vcmp.eq.s32.totalorder %v771, 2
        %v777 = vxor.u32 %v767, 2147483648
        %v778 = vsel %vm776, %v777, %v768
        %v779 = vsel %vm772, %v775, %v778
        %v780 = vsel %vm769, nan, %v779
        %v781 = vand.u32 2147483647, %v155
        %vm782 = vcmp.le.f32.partialorder %v781, 0.7853982
        %vm783 = vcmp.lt.s32.totalorder %v155, 0
        %v784 = vand.u32 %v155, 2139095040
        %v785 = vshrl.u32 %v784, 23
        %v786 = vsub.s32 %v785, 127
        %v787 = vand.u32 2147483647, %v155
        %v788 = vand.u32 %v787, 8388607
        %v789 = vor.u32 %v788, 8388608
        %v790 = vsub.s32 0, %v789
        %v791 = vadd.s32 %v786, 1
        %vm792 = vcmp.gt.s32.totalorder %v791, 0
        %v793 = vsel %vm792, %v791, 0
        %v794 = vshrl.u32 %v793, 5
        %v795 = vand.u32 %v793, 31
        %v796 = vsub.s32 32, %v795
        %v797 = vshrl.u32 683565275, %v796
        %v798 = vshll.u32 683565275, %v795
        %v799 = vshrl.u32 2475754826, %v796
        %v800 = vor.u32 %v798, %v799
        %v801 = vshll.u32 2475754826, %v795
        %v802 = vshrl.u32 2131351028, %v796
        %v803 = vor.u32 %v801, %v802
        %v804 = vshll.u32 2131351028, %v795
        %v805 = vshrl.u32 2102212464, %v796
        %v806 = vor.u32 %v804, %v805
        %v807 = vshll.u32 2102212464, %v795
        %v808 = vshrl.u32 920167782, %v796
        %v809 = vor.u32 %v807, %v808
        %v810 = vshll.u32 920167782, %v795
        %v811 = vshrl.u32 1326507024, %v796
        %v812 = vor.u32 %v810, %v811
        %vm813 = vcmp.lt.s32.totalorder %v794, 1
        %vm814 = vcmp.lt.s32.totalorder %v794, 2
        %vm815 = vcmp.lt.s32.totalorder %v794, 3
        %vm816 = vcmp.lt.s32.totalorder %v794, 4
        %v817 = vsel %vm813, %v797, %v800
        %v818 = vsel %vm816, %v806, 2102212464
        %v819 = vsel %vm815, %v803, %v818
        %v820 = vsel %vm814, %v817, %v819
        %v821 = vsel %vm813, %v800, %v803
        %v822 = vsel %vm816, %v809, 920167782
        %v823 = vsel %vm815, %v806, %v822
        %v824 = vsel %vm814, %v821, %v823
        %v825 = vsel %vm813, %v803, %v806
        %v826 = vsel %vm816, %v812, 1326507024
        %v827 = vsel %vm815, %v809, %v826
        %v828 = vsel %vm814, %v825, %v827
        %v829 = vshll.u32 %v789, 8
        %v830 = vmul.u32.u64.compose %v829, %v828
        %v831 = vextract.low.u32 %v830
        %v832 = vextract.high.u32 %v830
        %v833 = vmul.u32.u64.compose %v829, %v824
        %v834 = vextract.low.u32 %v833
        %v835 = vextract.high.u32 %v833
        %v836 = vmul.u32 %v829, %v820
        %v837 = vadd.s32 %v832, %v834
        %vm838 = vc.u32 %v832, %v834
        %v839 = vadd.s32 %v835, 1
        %v840 = vsel %vm838, %v839, %v835
        %v841 = vadd.s32 %v836, %v840
        %v842 = vadd.s32 %v841, 536870912
        %v843 = vshrl.u32 %v842, 30
        %v844 = vshll.u32 %v843, 30
        %v845 = vsub.s32 %v841, %v844
        %vm846 = vcmp.lt.s32.totalorder %v845, 0
        %v847 = vsub.s32 0, %v845
        %v848 = vsel %vm846, %v847, %v845
        %v849 = vclz %v848
        %v850 = vsub.s32 %v849, 2
        %vm851 = vcmp.gt.s32.totalorder 0, %v850
        %v852 = vsel %vm851, 0, %v850
        %v853 = vsub.s32 32, %v852
        %v854 = vshll.u32 %v845, %v852
        %v855 = vshrl.u32 %v837, %v853
        %v856 = vor.u32 %v854, %v855
        %v857 = vsub.s32 4294967266, %v852
        %v858 = vadd.s32 %v857, 127
        %v859 = vshll.u32 %v858, 23
        %v860 = vor.u32 4788187, %v859
        %v861 = vand.u32 2147483647, %v860
        %v863 = vcvt.s32.f32 %v856
        %v864 = vmul.f32 %v863, %v861
        %v865 = vxor.u32 %v864, 2147483648
        %v866 = vsel %vm783, %v865, %v864
        %v867 = vsub.s32 4, %v843
        %v868 = vsel %vm783, %v867, %v843
        %v869 = vsel %vm782, %v155, %v866
        %v870 = vsel %vm782, 0, %v868
        %v871 = vcosq.f32.pop %v869
        %v872 = vsinq.f32.pop %v869
        %vm873 = vweird.f32 %v155
        %v874 = vadd.s32 %v870, 3
        %v875 = vand.u32 %v874, 3
        %vm876 = vcmp.lt.s32.totalorder %v875, 2
        %vm877 = vcmp.eq.s32.totalorder %v875, 0
        %v878 = vxor.u32 %v872, 2147483648
        %v879 = vsel %vm877, %v871, %v878
        %vm880 = vcmp.eq.s32.totalorder %v875, 2
        %v881 = vxor.u32 %v871, 2147483648
        %v882 = vsel %vm880, %v881, %v872
        %v883 = vsel %vm876, %v879, %v882
        %v884 = vsel %vm873, nan, %v883
        %v885 = vand.u32 2147483647, %v156
        %vm886 = vcmp.le.f32.partialorder %v885, 0.7853982
        %vm887 = vcmp.lt.s32.totalorder %v156, 0
        %v888 = vand.u32 %v156, 2139095040
        %v889 = vshrl.u32 %v888, 23
        %v890 = vsub.s32 %v889, 127
        %v891 = vand.u32 2147483647, %v156
        %v892 = vand.u32 %v891, 8388607
        %v893 = vor.u32 %v892, 8388608
        %v894 = vsub.s32 0, %v893
        %v895 = vadd.s32 %v890, 1
        %vm896 = vcmp.gt.s32.totalorder %v895, 0
        %v897 = vsel %vm896, %v895, 0
        %v898 = vshrl.u32 %v897, 5
        %v899 = vand.u32 %v897, 31
        %v900 = vsub.s32 32, %v899
        %v901 = vshrl.u32 683565275, %v900
        %v902 = vshll.u32 683565275, %v899
        %v903 = vshrl.u32 2475754826, %v900
        %v904 = vor.u32 %v902, %v903
        %v905 = vshll.u32 2475754826, %v899
        %v906 = vshrl.u32 2131351028, %v900
        %v907 = vor.u32 %v905, %v906
        %v908 = vshll.u32 2131351028, %v899
        %v909 = vshrl.u32 2102212464, %v900
        %v910 = vor.u32 %v908, %v909
        %v911 = vshll.u32 2102212464, %v899
        %v912 = vshrl.u32 920167782, %v900
        %v913 = vor.u32 %v911, %v912
        %v914 = vshll.u32 920167782, %v899
        %v915 = vshrl.u32 1326507024, %v900
        %v916 = vor.u32 %v914, %v915
        %vm917 = vcmp.lt.s32.totalorder %v898, 1
        %vm918 = vcmp.lt.s32.totalorder %v898, 2
        %vm919 = vcmp.lt.s32.totalorder %v898, 3
        %vm920 = vcmp.lt.s32.totalorder %v898, 4
        %v921 = vsel %vm917, %v901, %v904
        %v922 = vsel %vm920, %v910, 2102212464
        %v923 = vsel %vm919, %v907, %v922
        %v924 = vsel %vm918, %v921, %v923
        %v925 = vsel %vm917, %v904, %v907
        %v926 = vsel %vm920, %v913, 920167782
        %v927 = vsel %vm919, %v910, %v926
        %v928 = vsel %vm918, %v925, %v927
        %v929 = vsel %vm917, %v907, %v910
        %v930 = vsel %vm920, %v916, 1326507024
        %v931 = vsel %vm919, %v913, %v930
        %v932 = vsel %vm918, %v929, %v931
        %v933 = vshll.u32 %v893, 8
        %v934 = vmul.u32.u64.compose %v933, %v932
        %v935 = vextract.low.u32 %v934
        %v936 = vextract.high.u32 %v934
        %v937 = vmul.u32.u64.compose %v933, %v928
        %v938 = vextract.low.u32 %v937
        %v939 = vextract.high.u32 %v937
        %v940 = vmul.u32 %v933, %v924
        %v941 = vadd.s32 %v936, %v938
        %vm942 = vc.u32 %v936, %v938
        %v943 = vadd.s32 %v939, 1
        %v944 = vsel %vm942, %v943, %v939
        %v945 = vadd.s32 %v940, %v944
        %v946 = vadd.s32 %v945, 536870912
        %v947 = vshrl.u32 %v946, 30
        %v948 = vshll.u32 %v947, 30
        %v949 = vsub.s32 %v945, %v948
        %vm950 = vcmp.lt.s32.totalorder %v949, 0
        %v951 = vsub.s32 0, %v949
        %v952 = vsel %vm950, %v951, %v949
        %v953 = vclz %v952
        %v954 = vsub.s32 %v953, 2
        %vm955 = vcmp.gt.s32.totalorder 0, %v954
        %v956 = vsel %vm955, 0, %v954
        %v957 = vsub.s32 32, %v956
        %v958 = vshll.u32 %v949, %v956
        %v959 = vshrl.u32 %v941, %v957
        %v960 = vor.u32 %v958, %v959
        %v961 = vsub.s32 4294967266, %v956
        %v962 = vadd.s32 %v961, 127
        %v963 = vshll.u32 %v962, 23
        %v964 = vor.u32 4788187, %v963
        %v965 = vand.u32 2147483647, %v964
        %v967 = vcvt.s32.f32 %v960
        %v968 = vmul.f32 %v967, %v965
        %v969 = vxor.u32 %v968, 2147483648
        %v970 = vsel %vm887, %v969, %v968
        %v971 = vsub.s32 4, %v947
        %v972 = vsel %vm887, %v971, %v947
        %v973 = vsel %vm886, %v156, %v970
        %v974 = vsel %vm886, 0, %v972
        %v975 = vcosq.f32.pop %v973
        %v976 = vsinq.f32.pop %v973
        %vm977 = vweird.f32 %v156
        %v978 = vadd.s32 %v974, 3
        %v979 = vand.u32 %v978, 3
        %vm980 = vcmp.lt.s32.totalorder %v979, 2
        %vm981 = vcmp.eq.s32.totalorder %v979, 0
        %v982 = vxor.u32 %v976, 2147483648
        %v983 = vsel %vm981, %v975, %v982
        %vm984 = vcmp.eq.s32.totalorder %v979, 2
        %v985 = vxor.u32 %v975, 2147483648
        %v986 = vsel %vm984, %v985, %v976
        %v987 = vsel %vm980, %v983, %v986
        %v988 = vsel %vm977, nan, %v987
        %989 = vst [vmem:[%s107] sm:$0xff] %v260
        %990 = vst [vmem:[%s107 + $0x8] sm:$0xff] %v364
        %991 = vst [vmem:[%s107 + $0x10] sm:$0xff] %v468
        %992 = vst [vmem:[%s107 + $0x18] sm:$0xff] %v572
        %993 = vst [vmem:[%s107 + $0x20] sm:$0xff] %v676
        %994 = vst [vmem:[%s107 + $0x28] sm:$0xff] %v780
        %995 = vst [vmem:[%s107 + $0x30] sm:$0xff] %v884
        %996 = vst [vmem:[%s107 + $0x38] sm:$0xff] %v988
        %s997 = sand.u32 %s45, 1
        %s998 = scalar_lea.sflag [#allocation4], %s997
        %s999 = sand.u32 %s45, 1
        %s1000 = smul.addr %s999, 64
        %s1001 = scalar_lea.vmem [#allocation5], %s1000
        // Predicated region
        $region29: #{tpu_custom_call.1} parent=23 // pred_check
          %p1002 = pneg %p55
        $region30: #{tpu_custom_call.1} parent=23 // pred_check_branch
          %1004 = sbr.rel (%p1002) target = $region32
        $region31: #{tpu_custom_call.1} parent=23 // pred_region
          %s1005 = smul.u32 8, %s16
          %s1007 = ssub.s32 1024, 1024
          %1008 = vsyncadd %s998, %s1007
          %s1009 = smul.addr %s1005, 128
          %s1010 = scalar_lea.hbm %s1, %s1009
          %s1011 = sshll.u32 %s1001, 4
          %s1012 = int_to_ptr.vmem [resolvable:$true] %s1011
          %1017 = dma.vmem_to_hbm [thread:$0]  %s1012, 1024, %s1010, %s998, 128, 128, 8
        $region32: #{tpu_custom_call.1} parent=23 // pred_fallthru
          _
      $region24: #{tpu_custom_call.1} parent=5 // pred_fallthru
        _
      %p1018 = scmp.le.s32.totalorder 2, %s11
      // Predicated region
      $region33: #{tpu_custom_call.1} parent=5 // pred_check
        %p1019 = pneg %p1018
      $region34: #{tpu_custom_call.1} parent=5 // pred_check_branch
        %1021 = sbr.rel (%p1019) target = $region36
      $region35: #{tpu_custom_call.1} parent=5 // pred_region
        %s1022 = ssub.s32 %s11, 2
        // Predicated region
        $region37: #{tpu_custom_call.1} parent=35 // pred_check
          %p1023 = pneg %p61
        $region38: #{tpu_custom_call.1} parent=35 // pred_check_branch
          %1025 = sbr.rel (%p1023) target = $region40
        $region39: #{tpu_custom_call.1} parent=35 // pred_region
          %s1026 = sand.u32 %s46, 1
          %s1027 = scalar_lea.sflag [#allocation4], %s1026
          %s1028 = sand.u32 %s46, 1
          %s1029 = smul.addr %s1028, 64
          %s1030 = scalar_lea.vmem [#allocation5], %s1029
          %1031 = dma.done %s1027, 1024
        $region40: #{tpu_custom_call.1} parent=35 // pred_fallthru
          _
      $region36: #{tpu_custom_call.1} parent=5 // pred_fallthru
        _
    $region6: #{tpu_custom_call.1} parent=1 // loop_footer
      %s15 = sadd.s32 1, %s11
    $region7: #{tpu_custom_call.1} parent=1 // loop_footer_branch
      %10 = sbr.rel target = $region3
    $region8: #{tpu_custom_call.1} parent=1 // loop_exit
      _
    %1032 = vsyncpa [#allocation3], 1
    %s1033 = scalar_lea.sflag [#allocation3], 1
    %1034 = vsyncpa %s1033, 1
    %1035 = vsyncpa [#allocation4], 1
    %s1036 = scalar_lea.sflag [#allocation4], 1
    %1037 = vsyncpa %s1036, 1

</llo_original>
